<compile_context>
chip_gen: v5e
topology: v5e:2x2
jax: 0.10.0
libtpu: 0.0.40
codegen_flags: <defaults>
</compile_context>

<pallas_src>
import math

import jax
import jax.numpy as jnp
from jax.experimental import pallas as pl
from jax.experimental.pallas import tpu as pltpu

NEG_SLOPE = 0.01                     # nn.LeakyReLU default negative_slope
BN_EPS = 1e-5
VMEM_LIMIT = 48 * 1024 * 1024        # safe on v5e/v6e (128 MiB) and v7x (64 MiB)
K_TILE_BUDGET = 24 * 1024 * 1024     # bf16 A+B double-buffer budget per call


def _round_up(x, m):
    return (x + m - 1) // m * m


# ----------------------------------------------------------------------------
# Pallas kernels
# ----------------------------------------------------------------------------
def _make_matmul_kernel(has_residual, slope, single_k):
    """Fused conv-as-matmul (BN scale pre-folded into W) + bias + optional
    residual + LeakyReLU."""
    if single_k:
        # Full K in one tile: no accumulator scratch, no k grid axis.
        def kernel(a_ref, b_ref, c_ref, *rest):
            if has_residual:
                r_ref, o_ref = rest
            else:
                (o_ref,) = rest
            y = jnp.dot(a_ref[...], b_ref[...],
                        preferred_element_type=jnp.float32)
            y = y + c_ref[...]
            if has_residual:
                y = y + r_ref[...].astype(jnp.float32)
            if slope is not None:
                y = jnp.where(y >= 0, y, slope * y)
            o_ref[...] = y.astype(o_ref.dtype)
        return kernel

    # Fallback for very large K: K-last reduction with f32 scratch.
    def kernel(a_ref, b_ref, c_ref, *rest):
        if has_residual:
            r_ref, o_ref, acc_ref = rest
        else:
            o_ref, acc_ref = rest
        kk = pl.program_id(2)

        @pl.when(kk == 0)
        def _():
            acc_ref[...] = jnp.zeros_like(acc_ref)

        acc_ref[...] += jnp.dot(a_ref[...], b_ref[...],
                                preferred_element_type=jnp.float32)

        @pl.when(kk == pl.num_programs(2) - 1)
        def _():
            y = acc_ref[...] + c_ref[...]
            if has_residual:
                y = y + r_ref[...].astype(jnp.float32)
            if slope is not None:
                y = jnp.where(y >= 0, y, slope * y)
            o_ref[...] = y.astype(o_ref.dtype)
    return kernel


def _maxpool_kernel(x_ref, o_ref):
    # x_ref: (P, TM, L) stacked window taps -> max over leading tap axis.
    o_ref[...] = jnp.max(x_ref[...], axis=0)


# ----------------------------------------------------------------------------
# Pallas wrappers
# ----------------------------------------------------------------------------
def _pick_k_tiles(k, tm, tn):
    """Full-K single tile when the double-buffered bf16 A/B tiles fit the
    budget; otherwise split K into multiples of 128."""
    def buf_bytes(tk):
        return 2 * 2 * tk * (tm + tn)       # 2 buffers * 2 bytes * tk * (tm+tn)
    if buf_bytes(k) <= K_TILE_BUDGET:
        return k, k, True
    kp = _round_up(k, 128)
    tk = min(kp, 4096)
    tk -= tk % 128
    while tk > 128 and (kp % tk != 0 or buf_bytes(tk) > K_TILE_BUDGET):
        tk -= 128
    return kp, tk, tk == kp


def _fused_matmul(a, w, bias, residual, slope):
    """out = act((a @ w) + bias [+ residual]); a:(M,K), w:(K,N) with BN scale
    already folded into w.  MXU operands are bf16; accumulation is f32;
    output is bf16 with a lane-dense (multiple-of-128) padded N."""
    m, k = a.shape
    n = w.shape[1]

    np_ = _round_up(n, 128)
    tn = 256 if (np_ >= 256 and np_ % 256 == 0) else 128
    if m >= 512 and m % 256 == 0:
        tm = 256
    elif m >= 128:
        tm = 128
    else:
        tm = _round_up(m, 16)                # bf16 sublane packing
    mp = _round_up(m, tm)
    kp, tk, single_k = _pick_k_tiles(k, tm, tn)

    ap = a.astype(jnp.bfloat16)
    if (mp, kp) != (m, k):
        ap = jnp.pad(ap, ((0, mp - m), (0, kp - k)))
    wp = w.astype(jnp.bfloat16)
    if (kp, np_) != (k, n):
        wp = jnp.pad(wp, ((0, kp - k), (0, np_ - n)))
    bp = bias.astype(jnp.float32)
    if np_ != n:
        bp = jnp.pad(bp, (0, np_ - n))
    bp = bp.reshape(1, np_)

    has_res = residual is not None
    args = [ap, wp, bp]
    if has_res:
        rp = residual.astype(jnp.bfloat16)
        if (mp, np_) != residual.shape:
            rp = jnp.pad(rp, ((0, mp - m), (0, np_ - n)))
        args.append(rp)

    if single_k:
        grid = (mp // tm, np_ // tn)
        in_specs = [
            pl.BlockSpec((tm, kp), lambda i, j: (i, 0)),
            pl.BlockSpec((kp, tn), lambda i, j: (0, j)),
            pl.BlockSpec((1, tn), lambda i, j: (0, j)),
        ]
        if has_res:
            in_specs.append(pl.BlockSpec((tm, tn), lambda i, j: (i, j)))
        out_specs = pl.BlockSpec((tm, tn), lambda i, j: (i, j))
        scratch = []
        semantics = ("parallel", "parallel")
    else:
        grid = (mp // tm, np_ // tn, kp // tk)
        in_specs = [
            pl.BlockSpec((tm, tk), lambda i, j, kk: (i, kk)),
            pl.BlockSpec((tk, tn), lambda i, j, kk: (kk, j)),
            pl.BlockSpec((1, tn), lambda i, j, kk: (0, j)),
        ]
        if has_res:
            in_specs.append(pl.BlockSpec((tm, tn), lambda i, j, kk: (i, j)))
        out_specs = pl.BlockSpec((tm, tn), lambda i, j, kk: (i, j))
        scratch = [pltpu.VMEM((tm, tn), jnp.float32)]
        semantics = ("parallel", "parallel", "arbitrary")

    out = pl.pallas_call(
        _make_matmul_kernel(has_res, slope, single_k),
        out_shape=jax.ShapeDtypeStruct((mp, np_), jnp.bfloat16),
        grid_spec=pltpu.PrefetchScalarGridSpec(
            num_scalar_prefetch=0,
            grid=grid,
            in_specs=in_specs,
            out_specs=out_specs,
            scratch_shapes=scratch,
        ),
        compiler_params=pltpu.CompilerParams(
            dimension_semantics=semantics,
            vmem_limit_bytes=VMEM_LIMIT),
    )(*args)
    return out[:m, :n]


def _extract_patches(x, ksize, stride, padding, dilation, pad_value,
                     stack_axis=-2):
    """im2col glue (plain JAX). x: (N, D, H, W, C).
    stack_axis=-2 -> (N, Do, Ho, Wo, P, C);  stack_axis=0 -> (P, N, Do, Ho, Wo, C)."""
    n, d, h, w, c = x.shape
    kd, kh, kw = ksize
    sd, sh, sw = stride
    pd, ph, pw = padding
    dd, dh, dw = dilation
    xp = jnp.pad(x, ((0, 0), (pd, pd), (ph, ph), (pw, pw), (0, 0)),
                 constant_values=pad_value)
    do = (d + 2 * pd - dd * (kd - 1) - 1) // sd + 1
    ho = (h + 2 * ph - dh * (kh - 1) - 1) // sh + 1
    wo = (w + 2 * pw - dw * (kw - 1) - 1) // sw + 1
    slabs = []
    for i in range(kd):
        for j in range(kh):
            for kq in range(kw):
                sl = xp[:,
                        i * dd:i * dd + (do - 1) * sd + 1:sd,
                        j * dh:j * dh + (ho - 1) * sh + 1:sh,
                        kq * dw:kq * dw + (wo - 1) * sw + 1:sw, :]
                slabs.append(sl)
    return jnp.stack(slabs, axis=stack_axis)


def conv_bn_act(x, w, bn, stride, padding, dilation, residual=None, slope=None):
    """x: (N,D,H,W,Cin) bf16, w: (kd,kh,kw,Cin,Cout) f32, bn: (scale, bias)."""
    kd, kh, kw, cin, cout = w.shape
    scale, bias = bn
    # Fold the inference-mode BN scale into the conv weights on the host.
    wm = (w * scale).reshape(kd * kh * kw * cin, cout)
    patches = _extract_patches(x, (kd, kh, kw), stride, padding, dilation, 0.0)
    nb, do, ho, wo, p, _ = patches.shape
    m = nb * do * ho * wo
    a = patches.reshape(m, p * cin)
    r2d = None if residual is None else residual.reshape(m, cout)
    out = _fused_matmul(a, wm, bias, r2d, slope)
    return out.reshape(nb, do, ho, wo, cout)


def maxpool3d(x, k=3, stride=2, pad=1):
    nb, d, h, w, c = x.shape
    # Stack the 27 window taps along a LEADING axis (no host transpose).
    patches = _extract_patches(x, (k,) * 3, (stride,) * 3, (pad,) * 3,
                               (1,) * 3, -jnp.inf, stack_axis=0)
    p = patches.shape[0]
    do, ho, wo = patches.shape[2], patches.shape[3], patches.shape[4]
    m = nb * do * ho * wo
    # Lane-dense view: fold (M, C) into (M*C/128, 128) when possible.
    if (m * c) % 128 == 0:
        mc, lanes = (m * c) // 128, 128
    else:
        mc, lanes = m, c
    stacked = patches.reshape(p, mc, lanes)
    tmc = 512 if mc >= 512 else _round_up(mc, 16)
    mcp = _round_up(mc, tmc)
    if mcp != mc:
        stacked = jnp.pad(stacked, ((0, 0), (0, mcp - mc), (0, 0)))

    out = pl.pallas_call(
        _maxpool_kernel,
        out_shape=jax.ShapeDtypeStruct((mcp, lanes), x.dtype),
        grid_spec=pltpu.PrefetchScalarGridSpec(
            num_scalar_prefetch=0,
            grid=(mcp // tmc,),
            in_specs=[pl.BlockSpec((p, tmc, lanes), lambda i: (0, i, 0))],
            out_specs=pl.BlockSpec((tmc, lanes), lambda i: (i, 0)),
        ),
        compiler_params=pltpu.CompilerParams(
            dimension_semantics=("parallel",),
            vmem_limit_bytes=VMEM_LIMIT),
    )(stacked)
    out = out[:mc].reshape(m, c)
    return out.reshape(nb, do, ho, wo, c)


# ----------------------------------------------------------------------------
# Parameter initialization (deterministic, synthetic)
# ----------------------------------------------------------------------------
def _kaiming_conv(key, k, cin, cout):
    # kaiming_normal_(mode='fan_out'): std = sqrt(2 / (cout * k^3))
    fan_out = cout * k * k * k
    std = math.sqrt(2.0 / fan_out)
    return std * jax.random.normal(key, (k, k, k, cin, cout), jnp.float32)


def _bn_params(c):
    # gamma=1, beta=0, running_mean=0, running_var=1 -> inference-mode affine
    scale = jnp.full((c,), 1.0 / math.sqrt(1.0 + BN_EPS), jnp.float32)
    bias = jnp.zeros((c,), jnp.float32)
    return scale, bias


def init_resnet(key, layers=(1, 1, 1, 1)):
    keys = iter(jax.random.split(key, 128))
    params = {
        "conv1_w": _kaiming_conv(next(keys), 7, 1, 64),
        "bn1": _bn_params(64),
        "layers": [],
    }
    inplanes = 64
    layer_cfgs = [(64, layers[0], 1, 1),
                  (128, layers[1], 2, 1),
                  (256, layers[2], 1, 2),
                  (512, layers[3], 1, 4)]
    for planes, nblocks, stride, dilation in layer_cfgs:
        blocks = []
        for b in range(nblocks):
            blk_stride = stride if b == 0 else 1
            blk = {
                "w1": _kaiming_conv(next(keys), 3, inplanes, planes),
                "bn1": _bn_params(planes),
                "w2": _kaiming_conv(next(keys), 3, planes, planes),
                "bn2": _bn_params(planes),
                "stride": blk_stride,
                "dilation": dilation,
            }
            if b == 0 and (stride != 1 or inplanes != planes):
                # shortcut_type='B' downsample: 1x1x1 conv + BN
                blk["down_w"] = _kaiming_conv(next(keys), 1, inplanes, planes)
                blk["down_bn"] = _bn_params(planes)
            blocks.append(blk)
            inplanes = planes
        params["layers"].append(blocks)
    return params


# ----------------------------------------------------------------------------
# Forward pass
# ----------------------------------------------------------------------------
def basic_block(x, blk):
    stride, dilation = blk["stride"], blk["dilation"]
    if "down_w" in blk:
        residual = conv_bn_act(x, blk["down_w"], blk["down_bn"],
                               (stride,) * 3, (0,) * 3, (1,) * 3, slope=None)
    else:
        residual = x
    out = conv_bn_act(x, blk["w1"], blk["bn1"],
                      (stride,) * 3, (dilation,) * 3, (dilation,) * 3,
                      slope=NEG_SLOPE)
    out = conv_bn_act(out, blk["w2"], blk["bn2"],
                      (1,) * 3, (dilation,) * 3, (dilation,) * 3,
                      residual=residual, slope=NEG_SLOPE)
    return out


def resnet_forward(params, x_ncdhw):
    # NCDHW f32 -> NDHWC bf16 (bf16 activations throughout the network)
    x = jnp.transpose(x_ncdhw, (0, 2, 3, 4, 1)).astype(jnp.bfloat16)
    # stem: conv7x7x7 s2 -> BN -> LeakyReLU -> maxpool3x3x3 s2
    x = conv_bn_act(x, params["conv1_w"], params["bn1"],
                    (2, 2, 2), (3, 3, 3), (1, 1, 1), slope=NEG_SLOPE)
    x = maxpool3d(x, 3, 2, 1)
    for blocks in params["layers"]:
        for blk in blocks:
            x = basic_block(x, blk)
    # back to NCDHW f32
    return jnp.transpose(x, (0, 4, 1, 2, 3)).astype(jnp.float32)


# ----------------------------------------------------------------------------
if __name__ == "__main__":
    key = jax.random.PRNGKey(0)
    pkey, xkey = jax.random.split(key)
    params = init_resnet(pkey, layers=(1, 1, 1, 1))
    # PyTorch conv1 expects a single input channel: NCDHW = (2, 1, 16, 16, 16)
    x = jax.random.normal(xkey, (2, 1, 16, 16, 16), jnp.float32)
    out = resnet_forward(params, x)
    out = jax.block_until_ready(out)
    assert out.shape == (2, 512, 2, 2, 2), out.shape
    assert bool(jnp.all(jnp.isfinite(out)))
    print("KERNEL_OK")
</pallas_src>

<mosaic_0001>
module attributes {stable_mosaic.version = 11 : i64} {
  func.func @kernel(%arg0: i32, %arg1: i32, %arg2: memref<256x343xbf16, #tpu.memory_space<vmem>>, %arg3: memref<343x128xbf16, #tpu.memory_space<vmem>>, %arg4: memref<1x128xf32, #tpu.memory_space<vmem>>, %arg5: memref<256x128xbf16, #tpu.memory_space<vmem>>) attributes {dimension_semantics = [#tpu.dimension_semantics<parallel>, #tpu.dimension_semantics<parallel>], iteration_bounds = array<i64: 4, 1>, scalar_prefetch = 0 : i64, scratch_operands = 0 : i64, tpu.core_type = #tpu.core_type<tc>, window_params = [{transform_indices = @transform_0, window_bounds = array<i64: 256, 343>}, {transform_indices = @transform_1, window_bounds = array<i64: 343, 128>}, {transform_indices = @transform_2, window_bounds = array<i64: 1, 128>}, {transform_indices = @transform_3, window_bounds = array<i64: 256, 128>}]} {
    %c0 = arith.constant 0 : index
    %c0_0 = arith.constant 0 : index
    %0 = vector.load %arg2[%c0, %c0_0] : memref<256x343xbf16, #tpu.memory_space<vmem>>, vector<256x343xbf16>
    %c0_1 = arith.constant 0 : index
    %c0_2 = arith.constant 0 : index
    %1 = vector.load %arg3[%c0_1, %c0_2] : memref<343x128xbf16, #tpu.memory_space<vmem>>, vector<343x128xbf16>
    %cst = arith.constant dense<0.000000e+00> : vector<256x128xf32>
    %2 = tpu.matmul %0, %1, %cst {dimension_numbers = #tpu.dot_dimension_numbers<[1], [0], [0], [1], [0, 0, 1, 1], [], []>} : vector<256x343xbf16>, vector<343x128xbf16>, vector<256x128xf32> -> vector<256x128xf32>
    %c0_3 = arith.constant 0 : index
    %c0_4 = arith.constant 0 : index
    %3 = vector.load %arg4[%c0_3, %c0_4] : memref<1x128xf32, #tpu.memory_space<vmem>>, vector<1x128xf32>
    %4 = vector.broadcast %3 : vector<1x128xf32> to vector<256x128xf32>
    %5 = arith.addf %2, %4 : vector<256x128xf32>
    %cst_5 = arith.constant 0.000000e+00 : f32
    %6 = vector.broadcast %cst_5 : f32 to vector<256x128xf32>
    %7 = arith.cmpf oge, %5, %6 : vector<256x128xf32>
    %cst_6 = arith.constant 0.00999999977 : f32
    %8 = vector.broadcast %cst_6 : f32 to vector<256x128xf32>
    %9 = arith.mulf %8, %5 : vector<256x128xf32>
    %10 = arith.select %7, %5, %9 : vector<256x128xi1>, vector<256x128xf32>
    %11 = arith.truncf %10 : vector<256x128xf32> to vector<256x128xbf16>
    %c0_7 = arith.constant 0 : index
    %c0_8 = arith.constant 0 : index
    %12 = vector.load %arg5[%c0_7, %c0_8] : memref<256x128xbf16, #tpu.memory_space<vmem>>, vector<256x128xbf16>
    tpu.vector_store %arg5[%c0_7, %c0_8], %11 {strides = array<i32>} : memref<256x128xbf16, #tpu.memory_space<vmem>>, vector<256x128xbf16>,
    return
  }
  func.func @transform_0(%arg0: i32, %arg1: i32) -> (i32, i32) {
    %c0_i32 = arith.constant 0 : i32
    %c0_i32_0 = arith.constant 0 : i32
    return %arg0, %c0_i32 : i32, i32
  }
  func.func @transform_1(%arg0: i32, %arg1: i32) -> (i32, i32) {
    %c0_i32 = arith.constant 0 : i32
    %c0_i32_0 = arith.constant 0 : i32
    return %c0_i32, %arg1 : i32, i32
  }
  func.func @transform_2(%arg0: i32, %arg1: i32) -> (i32, i32) {
    %c0_i32 = arith.constant 0 : i32
    %c0_i32_0 = arith.constant 0 : i32
    return %c0_i32, %arg1 : i32, i32
  }
  func.func @transform_3(%arg0: i32, %arg1: i32) -> (i32, i32) {
    %c0_i32 = arith.constant 0 : i32
    return %arg0, %arg1 : i32, i32
  }
}

</mosaic_0001>

<llo_original>
// kernel: tpu_custom_call.1
$region0: #{tpu_custom_call.1}
  #allocation0 [shape = 'u32[]', space=smem, size = 0x4, offset = 0x4, fixed_abs, tag = 'smem constant byte address 0x4 - core index']
  #allocation1 [shape = 'u32[72,128]{1,0:T(1,128)}', space=vmem, size = 0x9000, scoped, tag = 'internal scratch']
  %s0 = inlined_call_operand.vmem [shape: bf16[1024,343], index: 0, kind: input, shape index: {}]
  %s1 = inlined_call_operand.vmem [shape: bf16[343,128], index: 1, kind: input, shape index: {}]
  %s2 = inlined_call_operand.vmem [shape: f32[1,128], index: 2, kind: input, shape index: {}]
  %s3 = inlined_call_operand.hbm [shape: bf16[1024,128], index: 3, kind: output, shape index: {}]
  %s4 = sld [smem:[#allocation0]]
  $region45: #{tpu_custom_call.1} parent=0
    _
  %s6 = ssub.s32 1, %s4
  %s7 = scalar_select 0, %s6, %s4
  $region1: #{tpu_custom_call.1} parent=0
    #allocation2 [shape = 'u8[131072]{0}', space=vmem, size = 0x20000, scoped, tag = 'output window, operand 0']
    #allocation3 [shape = 's32[2]{0}', space=sflag, size = 0x8, scoped, tag = 'scoped memory for tpu_custom_call.1']
    %8 = vsyncpa [#allocation3], 0
    %s9 = scalar_lea.sflag [#allocation3], 1
    %10 = vsyncpa %s9, 0
    loop: start=0, step=1, limit=6
    $region2: #{tpu_custom_call.1} parent=1 // loop_pre_header
      _
    $region3: #{tpu_custom_call.1} parent=1 // loop_header
      %s12 = sphi 0, %s16
      %p13 = scmp.ge.s32.totalorder %s12, 6
      %s19 = sphi 0, %s31
      %s20 = sphi 0, %s27
      %s21 = sphi 0, %s19
      %s22 = sphi 0, %s20
      %s23 = sphi 0, %s21
      %s24 = sphi 0, %s22
      %s34 = sphi 0, %s36
      %s37 = sphi 0, %s34
      %s38 = sphi 0, %s37
      %s54 = sphi 0, %s38
      %s60 = sphi 0, %s62
      %s63 = sphi 0, %s60
      %s64 = sphi 0, %s63
      %s80 = sphi 0, %s64
      %s86 = sphi 0, %s88
      %s89 = sphi 0, %s86
      %s90 = sphi 0, %s89
      %s106 = sphi 0, %s90
      %s114 = sphi 0, %s116
      %s117 = sphi 0, %s114
      %s118 = sphi 0, %s117
      %s134 = sphi 0, %s118
    $region4: #{tpu_custom_call.1} parent=1 // loop_header_branch
      %15 = sbr.rel (%p13) target = $region8
    $region5: #{tpu_custom_call.1} parent=1 // loop_body
      %s17 = ssub.s32 %s12, 1
      %s18 = ssub.s32 %s12, 2
      %s25 = sadd.s32 1, %s20
      %p26 = scmp.ge.s32.totalorder %s25, 1
      %s27 = scalar_select %p26, 0, %s25
      %s28 = sadd.s32 1, %s19
      %s29 = scalar_select %p26, %s28, %s19
      %p30 = scmp.ge.s32.totalorder %s29, 4
      %s31 = scalar_select %p30, 0, %s29
      %s32 = ssub.s32 %s19, %s31
      %p33 = scmp.eq.s32.totalorder %s32, 0
      %s35 = sadd.s32 %s34, 1
      %s36 = scalar_select %p33, %s34, %s35
      %p39 = pneg %p33
      %p40 = scmp.eq.s32.totalorder %s12, 3
      %p41 = por %p39, %p40
      %p42 = scmp.ne.s32.totalorder %s34, %s37
      %p43 = scmp.eq.s32.totalorder %s12, 0
      %p44 = por %p42, %p43
      %p45 = scmp.ne.s32.totalorder %s34, %s37
      %p46 = scmp.eq.s32.totalorder %s17, 3
      %p47 = por %p45, %p46
      %p48 = scmp.ne.s32.totalorder %s37, %s38
      %p49 = scmp.eq.s32.totalorder %s17, 0
      %p50 = por %p48, %p49
      %p51 = scmp.ne.s32.totalorder %s37, %s38
      %p52 = scmp.eq.s32.totalorder %s18, 3
      %p53 = por %p51, %p52
      %p55 = scmp.ne.s32.totalorder %s38, %s54
      %p56 = scmp.eq.s32.totalorder %s18, 0
      %p57 = por %p55, %p56
      %s58 = ssub.s32 %s20, %s27
      %p59 = scmp.eq.s32.totalorder %s58, 0
      %s61 = sadd.s32 %s60, 1
      %s62 = scalar_select %p59, %s60, %s61
      %p65 = pneg %p59
      %p66 = scmp.eq.s32.totalorder %s12, 3
      %p67 = por %p65, %p66
      %p68 = scmp.ne.s32.totalorder %s60, %s63
      %p69 = scmp.eq.s32.totalorder %s12, 0
      %p70 = por %p68, %p69
      %p71 = scmp.ne.s32.totalorder %s60, %s63
      %p72 = scmp.eq.s32.totalorder %s17, 3
      %p73 = por %p71, %p72
      %p74 = scmp.ne.s32.totalorder %s63, %s64
      %p75 = scmp.eq.s32.totalorder %s17, 0
      %p76 = por %p74, %p75
      %p77 = scmp.ne.s32.totalorder %s63, %s64
      %p78 = scmp.eq.s32.totalorder %s18, 3
      %p79 = por %p77, %p78
      %p81 = scmp.ne.s32.totalorder %s64, %s80
      %p82 = scmp.eq.s32.totalorder %s18, 0
      %p83 = por %p81, %p82
      %s84 = ssub.s32 %s20, %s27
      %p85 = scmp.eq.s32.totalorder %s84, 0
      %s87 = sadd.s32 %s86, 1
      %s88 = scalar_select %p85, %s86, %s87
      %p91 = pneg %p85
      %p92 = scmp.eq.s32.totalorder %s12, 3
      %p93 = por %p91, %p92
      %p94 = scmp.ne.s32.totalorder %s86, %s89
      %p95 = scmp.eq.s32.totalorder %s12, 0
      %p96 = por %p94, %p95
      %p97 = scmp.ne.s32.totalorder %s86, %s89
      %p98 = scmp.eq.s32.totalorder %s17, 3
      %p99 = por %p97, %p98
      %p100 = scmp.ne.s32.totalorder %s89, %s90
      %p101 = scmp.eq.s32.totalorder %s17, 0
      %p102 = por %p100, %p101
      %p103 = scmp.ne.s32.totalorder %s89, %s90
      %p104 = scmp.eq.s32.totalorder %s18, 3
      %p105 = por %p103, %p104
      %p107 = scmp.ne.s32.totalorder %s90, %s106
      %p108 = scmp.eq.s32.totalorder %s18, 0
      %p109 = por %p107, %p108
      %s110 = ssub.s32 %s19, %s31
      %s111 = ssub.s32 %s20, %s27
      %s112 = sor.u32 %s110, %s111
      %p113 = scmp.eq.s32.totalorder %s112, 0
      %s115 = sadd.s32 %s114, 1
      %s116 = scalar_select %p113, %s114, %s115
      %p119 = pneg %p113
      %p120 = scmp.eq.s32.totalorder %s12, 3
      %p121 = por %p119, %p120
      %p122 = scmp.ne.s32.totalorder %s114, %s117
      %p123 = scmp.eq.s32.totalorder %s12, 0
      %p124 = por %p122, %p123
      %p125 = scmp.ne.s32.totalorder %s114, %s117
      %p126 = scmp.eq.s32.totalorder %s17, 3
      %p127 = por %p125, %p126
      %p128 = scmp.ne.s32.totalorder %s117, %s118
      %p129 = scmp.eq.s32.totalorder %s17, 0
      %p130 = por %p128, %p129
      %p131 = scmp.ne.s32.totalorder %s117, %s118
      %p132 = scmp.eq.s32.totalorder %s18, 3
      %p133 = por %p131, %p132
      %p135 = scmp.ne.s32.totalorder %s118, %s134
      %p136 = scmp.eq.s32.totalorder %s18, 0
      %p137 = por %p135, %p136
      %p138 = scmp.le.s32.totalorder 1, %s12
      %p139 = scmp.lt.s32.totalorder %s12, 5
      %p140 = pnand %p138, %p139
      %p141 = pneg %p140
      // Predicated region
      $region9: #{tpu_custom_call.1} parent=5 // pred_check
        _
      $region10: #{tpu_custom_call.1} parent=5 // pred_check_branch
        %143 = sbr.rel (%p140) target = $region12
      $region11: #{tpu_custom_call.1} parent=5 // pred_region
        %s144 = ssub.s32 %s12, 1
        // Predicated region
        $region13: #{tpu_custom_call.1} parent=11 // pred_check
          %p145 = pneg %p76
        $region14: #{tpu_custom_call.1} parent=11 // pred_check_branch
          %147 = sbr.rel (%p145) target = $region16
        $region15: #{tpu_custom_call.1} parent=11 // pred_region
          %p148 = scmp.lt.s32.totalorder %s22, 0
          %s149 = scalar_select %p148, %s22, 0
          %s150 = smul.addr %s149, 4
          %s151 = scalar_lea.vmem %s1, %s150
        $region16: #{tpu_custom_call.1} parent=11 // pred_fallthru
          _
        // Predicated region
        $region17: #{tpu_custom_call.1} parent=11 // pred_check
          %p152 = pneg %p102
        $region18: #{tpu_custom_call.1} parent=11 // pred_check_branch
          %154 = sbr.rel (%p152) target = $region20
        $region19: #{tpu_custom_call.1} parent=11 // pred_region
          %p155 = scmp.lt.s32.totalorder %s22, 0
          %s156 = scalar_select %p155, %s22, 0
          %s157 = scalar_lea.vmem %s2, %s156
        $region20: #{tpu_custom_call.1} parent=11 // pred_fallthru
          _
      $region12: #{tpu_custom_call.1} parent=5 // pred_fallthru
        _
      %p158 = scmp.lt.s32.totalorder %s12, 4
      // Predicated region
      $region21: #{tpu_custom_call.1} parent=5 // pred_check
        %p159 = pneg %p158
      $region22: #{tpu_custom_call.1} parent=5 // pred_check_branch
        %161 = sbr.rel (%p159) target = $region24
      $region23: #{tpu_custom_call.1} parent=5 // pred_region
        // Predicated region
        $region25: #{tpu_custom_call.1} parent=23 // pred_check
          %p162 = pneg %p44
        $region26: #{tpu_custom_call.1} parent=23 // pred_check_branch
          %164 = sbr.rel (%p162) target = $region28
        $region27: #{tpu_custom_call.1} parent=23 // pred_region
          %s165 = smul.u32 32, %s19
          %p166 = scmp.lt.s32.totalorder %s165, 127
          %s167 = scalar_select %p166, %s165, 127
          %s168 = smul.addr %s167, 3
          %s169 = smul.addr %s168, 4
          %s170 = scalar_lea.vmem %s0, %s169
          %s171 = smul.u32 32, %s19
        $region28: #{tpu_custom_call.1} parent=23 // pred_fallthru
          _
      $region24: #{tpu_custom_call.1} parent=5 // pred_fallthru
        _
      %p172 = scmp.le.s32.totalorder 1, %s12
      %p173 = scmp.lt.s32.totalorder %s12, 5
      %p174 = pnand %p172, %p173
      %p175 = pneg %p174
      // Predicated region
      $region29: #{tpu_custom_call.1} parent=5 // pred_check
        _
      $region30: #{tpu_custom_call.1} parent=5 // pred_check_branch
        %177 = sbr.rel (%p174) target = $region32
      $region31: #{tpu_custom_call.1} parent=5 // pred_region
        %s178 = ssub.s32 %s12, 1
        %s179 = smul.u32 32, %s21
        %p180 = scmp.lt.s32.totalorder %s179, 127
        %s181 = scalar_select %p180, %s179, 127
        %s182 = smul.addr %s181, 3
        %s183 = smul.addr %s182, 4
        %s184 = scalar_lea.vmem %s0, %s183
        %p185 = pneg %p50
        %p186 = pneg %p47
        %p187 = scmp.lt.s32.totalorder %s22, 0
        %s188 = scalar_select %p187, %s22, 0
        %s189 = smul.addr %s188, 4
        %s190 = scalar_lea.vmem %s1, %s189
        %p191 = pneg %p76
        %p192 = pneg %p73
        %p193 = scmp.lt.s32.totalorder %s22, 0
        %s194 = scalar_select %p193, %s22, 0
        %s195 = scalar_lea.vmem %s2, %s194
        %p196 = pneg %p102
        %p197 = pneg %p99
        %p198 = pneg %p130
        %p199 = pneg %p127
        %s200 = sand.u32 %s117, 1
        %s201 = scalar_lea.sflag [#allocation3], %s200
        %s202 = sand.u32 %s117, 1
        %s203 = smul.addr %s202, 128
        %s204 = scalar_lea.vmem [#allocation2], %s203
        %s205 = smul.u32 32, %s21
        %p206 = scmp.lt.s32.totalorder %s205, 127
        %s207 = scalar_select %p206, %s205, 127
        %s208 = smul.addr %s207, 3
        %s209 = smul.addr %s208, 4
        %s210 = scalar_lea.vmem %s0, %s209
        %s211 = smul.u32 32, %s21
        %p212 = scmp.lt.s32.totalorder %s22, 0
        %s213 = scalar_select %p212, %s22, 0
        %s214 = smul.addr %s213, 4
        %s215 = scalar_lea.vmem %s1, %s214
        %p216 = scmp.lt.s32.totalorder %s22, 0
        %s217 = scalar_select %p216, %s22, 0
        %s218 = scalar_lea.vmem %s2, %s217
        %s219 = smul.u32 32, %s21
        %v221 = vld [vmem:[%s210] sm:$0xff]
        %v222 = vld [vmem:[%s210 + $0x8] sm:$0xf]
        %v223 = vld [vmem:[%s210 + $0xc] sm:$0xff]
        %v224 = vld [vmem:[%s210 + $0x14] sm:$0xf]
        %v225 = vld [vmem:[%s210 + $0x18] sm:$0xff]
        %v226 = vld [vmem:[%s210 + $0x20] sm:$0xf]
        %v227 = vld [vmem:[%s210 + $0x24] sm:$0xff]
        %v228 = vld [vmem:[%s210 + $0x2c] sm:$0xf]
        %v229 = vld [vmem:[%s210 + $0x30] sm:$0xff]
        %v230 = vld [vmem:[%s210 + $0x38] sm:$0xf]
        %v231 = vld [vmem:[%s210 + $0x3c] sm:$0xff]
        %v232 = vld [vmem:[%s210 + $0x44] sm:$0xf]
        %v233 = vld [vmem:[%s210 + $0x48] sm:$0xff]
        %v234 = vld [vmem:[%s210 + $0x50] sm:$0xf]
        %v235 = vld [vmem:[%s210 + $0x54] sm:$0xff]
        %v236 = vld [vmem:[%s210 + $0x5c] sm:$0xf]
        %v237 = vld [vmem:[%s210 + $0x60] sm:$0xff]
        %v238 = vld [vmem:[%s210 + $0x68] sm:$0xf]
        %v239 = vld [vmem:[%s210 + $0x6c] sm:$0xff]
        %v240 = vld [vmem:[%s210 + $0x74] sm:$0xf]
        %v241 = vld [vmem:[%s210 + $0x78] sm:$0xff]
        %v242 = vld [vmem:[%s210 + $0x80] sm:$0xf]
        %v243 = vld [vmem:[%s210 + $0x84] sm:$0xff]
        %v244 = vld [vmem:[%s210 + $0x8c] sm:$0xf]
        %v245 = vld [vmem:[%s210 + $0x90] sm:$0xff]
        %v246 = vld [vmem:[%s210 + $0x98] sm:$0xf]
        %v247 = vld [vmem:[%s210 + $0x9c] sm:$0xff]
        %v248 = vld [vmem:[%s210 + $0xa4] sm:$0xf]
        %v249 = vld [vmem:[%s210 + $0xa8] sm:$0xff]
        %v250 = vld [vmem:[%s210 + $0xb0] sm:$0xf]
        %v251 = vld [vmem:[%s210 + $0xb4] sm:$0xff]
        %v252 = vld [vmem:[%s210 + $0xbc] sm:$0xf]
        %v253 = vld [vmem:[%s210 + $0xc0] sm:$0xff]
        %v254 = vld [vmem:[%s210 + $0xc8] sm:$0xf]
        %v255 = vld [vmem:[%s210 + $0xcc] sm:$0xff]
        %v256 = vld [vmem:[%s210 + $0xd4] sm:$0xf]
        %v257 = vld [vmem:[%s210 + $0xd8] sm:$0xff]
        %v258 = vld [vmem:[%s210 + $0xe0] sm:$0xf]
        %v259 = vld [vmem:[%s210 + $0xe4] sm:$0xff]
        %v260 = vld [vmem:[%s210 + $0xec] sm:$0xf]
        %v261 = vld [vmem:[%s210 + $0xf0] sm:$0xff]
        %v262 = vld [vmem:[%s210 + $0xf8] sm:$0xf]
        %v263 = vld [vmem:[%s210 + $0xfc] sm:$0xff]
        %v264 = vld [vmem:[%s210 + $0x104] sm:$0xf]
        %v265 = vld [vmem:[%s210 + $0x108] sm:$0xff]
        %v266 = vld [vmem:[%s210 + $0x110] sm:$0xf]
        %v267 = vld [vmem:[%s210 + $0x114] sm:$0xff]
        %v268 = vld [vmem:[%s210 + $0x11c] sm:$0xf]
        %v269 = vld [vmem:[%s210 + $0x120] sm:$0xff]
        %v270 = vld [vmem:[%s210 + $0x128] sm:$0xf]
        %v271 = vld [vmem:[%s210 + $0x12c] sm:$0xff]
        %v272 = vld [vmem:[%s210 + $0x134] sm:$0xf]
        %v273 = vld [vmem:[%s210 + $0x138] sm:$0xff]
        %v274 = vld [vmem:[%s210 + $0x140] sm:$0xf]
        %v275 = vld [vmem:[%s210 + $0x144] sm:$0xff]
        %v276 = vld [vmem:[%s210 + $0x14c] sm:$0xf]
        %v277 = vld [vmem:[%s210 + $0x150] sm:$0xff]
        %v278 = vld [vmem:[%s210 + $0x158] sm:$0xf]
        %v279 = vld [vmem:[%s210 + $0x15c] sm:$0xff]
        %v280 = vld [vmem:[%s210 + $0x164] sm:$0xf]
        %v281 = vld [vmem:[%s210 + $0x168] sm:$0xff]
        %v282 = vld [vmem:[%s210 + $0x170] sm:$0xf]
        %v283 = vld [vmem:[%s210 + $0x174] sm:$0xff]
        %v284 = vld [vmem:[%s210 + $0x17c] sm:$0xf]
        %v285 = vld [vmem:[%s215] sm:$0xf]
        %v286 = vld [vmem:[%s215 + $0x4] sm:$0xf]
        %v287 = vld [vmem:[%s215 + $0x8] sm:$0xf]
        %v288 = vld [vmem:[%s215 + $0xc] sm:$0xf]
        %v289 = vld [vmem:[%s215 + $0x10] sm:$0xf]
        %v290 = vld [vmem:[%s215 + $0x14] sm:$0xf]
        %v291 = vld [vmem:[%s215 + $0x18] sm:$0xf]
        %v292 = vld [vmem:[%s215 + $0x1c] sm:$0xf]
        %v293 = vld [vmem:[%s215 + $0x20] sm:$0xf]
        %v294 = vld [vmem:[%s215 + $0x24] sm:$0xf]
        %v295 = vld [vmem:[%s215 + $0x28] sm:$0xf]
        %v296 = vld [vmem:[%s215 + $0x2c] sm:$0xf]
        %v297 = vld [vmem:[%s215 + $0x30] sm:$0xf]
        %v298 = vld [vmem:[%s215 + $0x34] sm:$0xf]
        %v299 = vld [vmem:[%s215 + $0x38] sm:$0xf]
        %v300 = vld [vmem:[%s215 + $0x3c] sm:$0xf]
        %v301 = vld [vmem:[%s215 + $0x40] sm:$0xf]
        %v302 = vld [vmem:[%s215 + $0x44] sm:$0xf]
        %v303 = vld [vmem:[%s215 + $0x48] sm:$0xf]
        %v304 = vld [vmem:[%s215 + $0x4c] sm:$0xf]
        %v305 = vld [vmem:[%s215 + $0x50] sm:$0xf]
        %v306 = vld [vmem:[%s215 + $0x54] sm:$0xf]
        %v307 = vld [vmem:[%s215 + $0x58] sm:$0xf]
        %v308 = vld [vmem:[%s215 + $0x5c] sm:$0xf]
        %v309 = vld [vmem:[%s215 + $0x60] sm:$0xf]
        %v310 = vld [vmem:[%s215 + $0x64] sm:$0xf]
        %v311 = vld [vmem:[%s215 + $0x68] sm:$0xf]
        %v312 = vld [vmem:[%s215 + $0x6c] sm:$0xf]
        %v313 = vld [vmem:[%s215 + $0x70] sm:$0xf]
        %v314 = vld [vmem:[%s215 + $0x74] sm:$0xf]
        %v315 = vld [vmem:[%s215 + $0x78] sm:$0xf]
        %v316 = vld [vmem:[%s215 + $0x7c] sm:$0xf]
        %v317 = vld [vmem:[%s215 + $0x80] sm:$0xf]
        %v318 = vld [vmem:[%s215 + $0x84] sm:$0xf]
        %v319 = vld [vmem:[%s215 + $0x88] sm:$0xf]
        %v320 = vld [vmem:[%s215 + $0x8c] sm:$0xf]
        %v321 = vld [vmem:[%s215 + $0x90] sm:$0xf]
        %v322 = vld [vmem:[%s215 + $0x94] sm:$0xf]
        %v323 = vld [vmem:[%s215 + $0x98] sm:$0xf]
        %v324 = vld [vmem:[%s215 + $0x9c] sm:$0xf]
        %v325 = vld [vmem:[%s215 + $0xa0] sm:$0xf]
        %v326 = vld [vmem:[%s215 + $0xa4] sm:$0xf]
        %v327 = vld [vmem:[%s215 + $0xa8] sm:$0xf]
        %v328 = vld [vmem:[%s218] sm:$0x1]
        %v330 = vperm.slane %v328, 0
        %v396 = vunpack.c.l.b16 %v221
        %v397 = vunpack.c.h.b16 %v221
        %v398 = vunpack.c.l.b16 %v222
        %v399 = vunpack.c.l.b16 %v223
        %v400 = vunpack.c.h.b16 %v223
        %v401 = vunpack.c.l.b16 %v224
        %v402 = vunpack.c.l.b16 %v225
        %v403 = vunpack.c.h.b16 %v225
        %v404 = vunpack.c.l.b16 %v226
        %v405 = vunpack.c.l.b16 %v227
        %v406 = vunpack.c.h.b16 %v227
        %v407 = vunpack.c.l.b16 %v228
        %v408 = vunpack.c.l.b16 %v229
        %v409 = vunpack.c.h.b16 %v229
        %v410 = vunpack.c.l.b16 %v230
        %v411 = vunpack.c.l.b16 %v231
        %v412 = vunpack.c.h.b16 %v231
        %v413 = vunpack.c.l.b16 %v232
        %v414 = vunpack.c.l.b16 %v233
        %v415 = vunpack.c.h.b16 %v233
        %v416 = vunpack.c.l.b16 %v234
        %v417 = vunpack.c.l.b16 %v235
        %v418 = vunpack.c.h.b16 %v235
        %v419 = vunpack.c.l.b16 %v236
        %v420 = vunpack.c.l.b16 %v237
        %v421 = vunpack.c.h.b16 %v237
        %v422 = vunpack.c.l.b16 %v238
        %v423 = vunpack.c.l.b16 %v239
        %v424 = vunpack.c.h.b16 %v239
        %v425 = vunpack.c.l.b16 %v240
        %v426 = vunpack.c.l.b16 %v241
        %v427 = vunpack.c.h.b16 %v241
        %v428 = vunpack.c.l.b16 %v242
        %v429 = vunpack.c.l.b16 %v243
        %v430 = vunpack.c.h.b16 %v243
        %v431 = vunpack.c.l.b16 %v244
        %v432 = vunpack.c.l.b16 %v245
        %v433 = vunpack.c.h.b16 %v245
        %v434 = vunpack.c.l.b16 %v246
        %v435 = vunpack.c.l.b16 %v247
        %v436 = vunpack.c.h.b16 %v247
        %v437 = vunpack.c.l.b16 %v248
        %v438 = vunpack.c.l.b16 %v249
        %v439 = vunpack.c.h.b16 %v249
        %v440 = vunpack.c.l.b16 %v250
        %v441 = vunpack.c.l.b16 %v251
        %v442 = vunpack.c.h.b16 %v251
        %v443 = vunpack.c.l.b16 %v252
        %v444 = vunpack.c.l.b16 %v253
        %v445 = vunpack.c.h.b16 %v253
        %v446 = vunpack.c.l.b16 %v254
        %v447 = vunpack.c.l.b16 %v255
        %v448 = vunpack.c.h.b16 %v255
        %v449 = vunpack.c.l.b16 %v256
        %v450 = vunpack.c.l.b16 %v257
        %v451 = vunpack.c.h.b16 %v257
        %v452 = vunpack.c.l.b16 %v258
        %v453 = vunpack.c.l.b16 %v259
        %v454 = vunpack.c.h.b16 %v259
        %v455 = vunpack.c.l.b16 %v260
        %v456 = vunpack.c.l.b16 %v261
        %v457 = vunpack.c.h.b16 %v261
        %v458 = vunpack.c.l.b16 %v262
        %v459 = vunpack.c.l.b16 %v263
        %v460 = vunpack.c.h.b16 %v263
        %v461 = vunpack.c.l.b16 %v264
        %v462 = vunpack.c.l.b16 %v265
        %v463 = vunpack.c.h.b16 %v265
        %v464 = vunpack.c.l.b16 %v266
        %v465 = vunpack.c.l.b16 %v267
        %v466 = vunpack.c.h.b16 %v267
        %v467 = vunpack.c.l.b16 %v268
        %v468 = vunpack.c.l.b16 %v269
        %v469 = vunpack.c.h.b16 %v269
        %v470 = vunpack.c.l.b16 %v270
        %v471 = vunpack.c.l.b16 %v271
        %v472 = vunpack.c.h.b16 %v271
        %v473 = vunpack.c.l.b16 %v272
        %v474 = vunpack.c.l.b16 %v273
        %v475 = vunpack.c.h.b16 %v273
        %v476 = vunpack.c.l.b16 %v274
        %v477 = vunpack.c.l.b16 %v275
        %v478 = vunpack.c.h.b16 %v275
        %v479 = vunpack.c.l.b16 %v276
        %v480 = vunpack.c.l.b16 %v277
        %v481 = vunpack.c.h.b16 %v277
        %v482 = vunpack.c.l.b16 %v278
        %v483 = vunpack.c.l.b16 %v279
        %v484 = vunpack.c.h.b16 %v279
        %v485 = vunpack.c.l.b16 %v280
        %v486 = vunpack.c.l.b16 %v281
        %v487 = vunpack.c.h.b16 %v281
        %v488 = vunpack.c.l.b16 %v282
        %v489 = vunpack.c.l.b16 %v283
        %v490 = vunpack.c.h.b16 %v283
        %v491 = vunpack.c.l.b16 %v284
        %v492 = vpack.c.b16 %v399, %v396
        %v493 = vpack.c.b16 %v400, %v397
        %v494 = vpack.c.b16 %v401, %v398
        %v495 = vpack.c.b16 %v405, %v402
        %v496 = vpack.c.b16 %v406, %v403
        %v497 = vpack.c.b16 %v407, %v404
        %v498 = vpack.c.b16 %v411, %v408
        %v499 = vpack.c.b16 %v412, %v409
        %v500 = vpack.c.b16 %v413, %v410
        %v501 = vpack.c.b16 %v417, %v414
        %v502 = vpack.c.b16 %v418, %v415
        %v503 = vpack.c.b16 %v419, %v416
        %v504 = vpack.c.b16 %v423, %v420
        %v505 = vpack.c.b16 %v424, %v421
        %v506 = vpack.c.b16 %v425, %v422
        %v507 = vpack.c.b16 %v429, %v426
        %v508 = vpack.c.b16 %v430, %v427
        %v509 = vpack.c.b16 %v431, %v428
        %v510 = vpack.c.b16 %v435, %v432
        %v511 = vpack.c.b16 %v436, %v433
        %v512 = vpack.c.b16 %v437, %v434
        %v513 = vpack.c.b16 %v441, %v438
        %v514 = vpack.c.b16 %v442, %v439
        %v515 = vpack.c.b16 %v443, %v440
        %v516 = vpack.c.b16 %v447, %v444
        %v517 = vpack.c.b16 %v448, %v445
        %v518 = vpack.c.b16 %v449, %v446
        %v519 = vpack.c.b16 %v453, %v450
        %v520 = vpack.c.b16 %v454, %v451
        %v521 = vpack.c.b16 %v455, %v452
        %v522 = vpack.c.b16 %v459, %v456
        %v523 = vpack.c.b16 %v460, %v457
        %v524 = vpack.c.b16 %v461, %v458
        %v525 = vpack.c.b16 %v465, %v462
        %v526 = vpack.c.b16 %v466, %v463
        %v527 = vpack.c.b16 %v467, %v464
        %v528 = vpack.c.b16 %v471, %v468
        %v529 = vpack.c.b16 %v472, %v469
        %v530 = vpack.c.b16 %v473, %v470
        %v531 = vpack.c.b16 %v477, %v474
        %v532 = vpack.c.b16 %v478, %v475
        %v533 = vpack.c.b16 %v479, %v476
        %v534 = vpack.c.b16 %v483, %v480
        %v535 = vpack.c.b16 %v484, %v481
        %v536 = vpack.c.b16 %v485, %v482
        %v537 = vpack.c.b16 %v489, %v486
        %v538 = vpack.c.b16 %v490, %v487
        %v539 = vpack.c.b16 %v491, %v488
        %v615 = vunpack.c.l.b16 %v285
        %v616 = vunpack.c.l.b16 %v286
        %v617 = vunpack.c.l.b16 %v287
        %v618 = vunpack.c.l.b16 %v288
        %v619 = vunpack.c.l.b16 %v289
        %v620 = vunpack.c.l.b16 %v290
        %v621 = vunpack.c.l.b16 %v291
        %v622 = vunpack.c.l.b16 %v292
        %v623 = vunpack.c.l.b16 %v293
        %v624 = vunpack.c.l.b16 %v294
        %v625 = vunpack.c.l.b16 %v295
        %v626 = vunpack.c.l.b16 %v296
        %v627 = vunpack.c.l.b16 %v297
        %v628 = vunpack.c.l.b16 %v298
        %v629 = vunpack.c.l.b16 %v299
        %v630 = vunpack.c.l.b16 %v300
        %v631 = vunpack.c.l.b16 %v301
        %v632 = vunpack.c.l.b16 %v302
        %v633 = vunpack.c.l.b16 %v303
        %v634 = vunpack.c.l.b16 %v304
        %v635 = vunpack.c.l.b16 %v305
        %v636 = vunpack.c.l.b16 %v306
        %v637 = vunpack.c.l.b16 %v307
        %v638 = vunpack.c.l.b16 %v308
        %v639 = vunpack.c.l.b16 %v309
        %v640 = vunpack.c.l.b16 %v310
        %v641 = vunpack.c.l.b16 %v311
        %v642 = vunpack.c.l.b16 %v312
        %v643 = vunpack.c.l.b16 %v313
        %v644 = vunpack.c.l.b16 %v314
        %v645 = vunpack.c.l.b16 %v315
        %v646 = vunpack.c.l.b16 %v316
        %v647 = vunpack.c.l.b16 %v317
        %v648 = vunpack.c.l.b16 %v318
        %v649 = vunpack.c.l.b16 %v319
        %v650 = vunpack.c.l.b16 %v320
        %v651 = vunpack.c.l.b16 %v321
        %v652 = vunpack.c.l.b16 %v322
        %v653 = vunpack.c.l.b16 %v323
        %v654 = vunpack.c.l.b16 %v324
        %v655 = vunpack.c.l.b16 %v325
        %v656 = vunpack.c.l.b16 %v326
        %v657 = vunpack.c.l.b16 %v327
        %v658 = vpack.c.b16 %v616, %v615
        %v659 = vpack.c.b16 %v618, %v617
        %v660 = vpack.c.b16 %v620, %v619
        %v661 = vpack.c.b16 %v622, %v621
        %v662 = vpack.c.b16 %v624, %v623
        %v663 = vpack.c.b16 %v626, %v625
        %v664 = vpack.c.b16 %v628, %v627
        %v665 = vpack.c.b16 %v630, %v629
        %v666 = vpack.c.b16 %v632, %v631
        %v667 = vpack.c.b16 %v634, %v633
        %v668 = vpack.c.b16 %v636, %v635
        %v669 = vpack.c.b16 %v638, %v637
        %v670 = vpack.c.b16 %v640, %v639
        %v671 = vpack.c.b16 %v642, %v641
        %v672 = vpack.c.b16 %v644, %v643
        %v673 = vpack.c.b16 %v646, %v645
        %v674 = vpack.c.b16 %v648, %v647
        %v675 = vpack.c.b16 %v650, %v649
        %v676 = vpack.c.b16 %v652, %v651
        %v677 = vpack.c.b16 %v654, %v653
        %v678 = vpack.c.b16 %v656, %v655
        %v679 = vpack.c.b16 %v657, %v657
        %vm701 = vcmask 711680
        %v703 = vsel %vm701, %v494, 0
        %v706 = vsel %vm701, %v497, 0
        %v709 = vsel %vm701, %v500, 0
        %v712 = vsel %vm701, %v503, 0
        %v715 = vsel %vm701, %v506, 0
        %v718 = vsel %vm701, %v509, 0
        %v721 = vsel %vm701, %v512, 0
        %v724 = vsel %vm701, %v515, 0
        %v727 = vsel %vm701, %v518, 0
        %v730 = vsel %vm701, %v521, 0
        %v733 = vsel %vm701, %v524, 0
        %v736 = vsel %vm701, %v527, 0
        %v739 = vsel %vm701, %v530, 0
        %v742 = vsel %vm701, %v533, 0
        %v745 = vsel %vm701, %v536, 0
        %v748 = vsel %vm701, %v539, 0
        %vm750 = vcmask 1042432
        %vm751 = vcmask 1043456
        %v752 = vsel %vm750, 4294967295, 65535
        %v753 = vsel %vm751, %v752, 0
        %v755 = vand.u32 %v679, %v753
        %757 = vmatpush.bf16.msra.mxu0 %v665
        %758 = vmatpush.bf16.msra.mxu0 %v664
        %759 = vmatpush.bf16.msra.mxu0 %v663
        %760 = vmatpush.bf16.msra.mxu0 %v662
        %761 = vmatpush.bf16.msra.mxu0 %v661
        %762 = vmatpush.bf16.msra.mxu0 %v660
        %763 = vmatpush.bf16.msra.mxu0 %v659
        %764 = vmatpush.bf16.msra.mxu0 %v658
        %765 = vmatmul.bf16.gmra.mxu0 %v492
        %v766 = vpop.f32.mrf.mxu0
        %v767 = vadd.f32 %v330, %v766
        %v768 = vpop.f32.mrf.mxu0
        %v769 = vadd.f32 %v330, %v768
        %770 = vmatmul.bf16.gmra.mxu0 %v495
        %v771 = vpop.f32.mrf.mxu0
        %v772 = vadd.f32 %v330, %v771
        %v773 = vpop.f32.mrf.mxu0
        %v774 = vadd.f32 %v330, %v773
        %775 = vmatmul.bf16.gmra.mxu0 %v498
        %v776 = vpop.f32.mrf.mxu0
        %v777 = vadd.f32 %v330, %v776
        %v778 = vpop.f32.mrf.mxu0
        %v779 = vadd.f32 %v330, %v778
        %780 = vmatmul.bf16.gmra.mxu0 %v501
        %v781 = vpop.f32.mrf.mxu0
        %v782 = vadd.f32 %v330, %v781
        %v783 = vpop.f32.mrf.mxu0
        %v784 = vadd.f32 %v330, %v783
        %785 = vmatmul.bf16.gmra.mxu0 %v504
        %v786 = vpop.f32.mrf.mxu0
        %v787 = vadd.f32 %v330, %v786
        %v788 = vpop.f32.mrf.mxu0
        %v789 = vadd.f32 %v330, %v788
        %790 = vmatmul.bf16.gmra.mxu0 %v507
        %v791 = vpop.f32.mrf.mxu0
        %v792 = vadd.f32 %v330, %v791
        %v793 = vpop.f32.mrf.mxu0
        %v794 = vadd.f32 %v330, %v793
        %795 = vmatmul.bf16.gmra.mxu0 %v510
        %v796 = vpop.f32.mrf.mxu0
        %v797 = vadd.f32 %v330, %v796
        %v798 = vpop.f32.mrf.mxu0
        %v799 = vadd.f32 %v330, %v798
        %800 = vmatmul.bf16.gmra.mxu0 %v513
        %v801 = vpop.f32.mrf.mxu0
        %v802 = vadd.f32 %v330, %v801
        %v803 = vpop.f32.mrf.mxu0
        %v804 = vadd.f32 %v330, %v803
        %805 = vmatmul.bf16.gmra.mxu0 %v516
        %v806 = vpop.f32.mrf.mxu0
        %v807 = vadd.f32 %v330, %v806
        %v808 = vpop.f32.mrf.mxu0
        %v809 = vadd.f32 %v330, %v808
        %810 = vmatmul.bf16.gmra.mxu0 %v519
        %v811 = vpop.f32.mrf.mxu0
        %v812 = vadd.f32 %v330, %v811
        %v813 = vpop.f32.mrf.mxu0
        %v814 = vadd.f32 %v330, %v813
        %815 = vmatmul.bf16.gmra.mxu0 %v522
        %v816 = vpop.f32.mrf.mxu0
        %v817 = vadd.f32 %v330, %v816
        %v818 = vpop.f32.mrf.mxu0
        %v819 = vadd.f32 %v330, %v818
        %820 = vmatmul.bf16.gmra.mxu0 %v525
        %v821 = vpop.f32.mrf.mxu0
        %v822 = vadd.f32 %v330, %v821
        %v823 = vpop.f32.mrf.mxu0
        %v824 = vadd.f32 %v330, %v823
        %825 = vmatmul.bf16.gmra.mxu0 %v528
        %v826 = vpop.f32.mrf.mxu0
        %v827 = vadd.f32 %v330, %v826
        %v828 = vpop.f32.mrf.mxu0
        %v829 = vadd.f32 %v330, %v828
        %830 = vmatmul.bf16.gmra.mxu0 %v531
        %v831 = vpop.f32.mrf.mxu0
        %v832 = vadd.f32 %v330, %v831
        %v833 = vpop.f32.mrf.mxu0
        %v834 = vadd.f32 %v330, %v833
        %835 = vmatmul.bf16.gmra.mxu0 %v534
        %v836 = vpop.f32.mrf.mxu0
        %v837 = vadd.f32 %v330, %v836
        %v838 = vpop.f32.mrf.mxu0
        %v839 = vadd.f32 %v330, %v838
        %840 = vmatmul.bf16.gmra.mxu0 %v537
        %v841 = vpop.f32.mrf.mxu0
        %v842 = vadd.f32 %v330, %v841
        %v843 = vpop.f32.mrf.mxu0
        %v844 = vadd.f32 %v330, %v843
        %845 = vdwg.mxu0
        %846 = vmatpush.bf16.msra.mxu0 %v673
        %847 = vmatpush.bf16.msra.mxu0 %v672
        %848 = vmatpush.bf16.msra.mxu0 %v671
        %849 = vmatpush.bf16.msra.mxu0 %v670
        %850 = vmatpush.bf16.msra.mxu0 %v669
        %851 = vmatpush.bf16.msra.mxu0 %v668
        %852 = vmatpush.bf16.msra.mxu0 %v667
        %853 = vmatpush.bf16.msra.mxu0 %v666
        %854 = vmatmul.bf16.gmra.mxu0 %v493
        %v855 = vpop.f32.mrf.mxu0
        %v856 = vadd.f32 %v767, %v855
        %v857 = vpop.f32.mrf.mxu0
        %v858 = vadd.f32 %v769, %v857
        %859 = vmatmul.bf16.gmra.mxu0 %v496
        %v860 = vpop.f32.mrf.mxu0
        %v861 = vadd.f32 %v772, %v860
        %v862 = vpop.f32.mrf.mxu0
        %v863 = vadd.f32 %v774, %v862
        %864 = vmatmul.bf16.gmra.mxu0 %v499
        %v865 = vpop.f32.mrf.mxu0
        %v866 = vadd.f32 %v777, %v865
        %v867 = vpop.f32.mrf.mxu0
        %v868 = vadd.f32 %v779, %v867
        %869 = vmatmul.bf16.gmra.mxu0 %v502
        %v870 = vpop.f32.mrf.mxu0
        %v871 = vadd.f32 %v782, %v870
        %v872 = vpop.f32.mrf.mxu0
        %v873 = vadd.f32 %v784, %v872
        %874 = vmatmul.bf16.gmra.mxu0 %v505
        %v875 = vpop.f32.mrf.mxu0
        %v876 = vadd.f32 %v787, %v875
        %v877 = vpop.f32.mrf.mxu0
        %v878 = vadd.f32 %v789, %v877
        %879 = vmatmul.bf16.gmra.mxu0 %v508
        %v880 = vpop.f32.mrf.mxu0
        %v881 = vadd.f32 %v792, %v880
        %v882 = vpop.f32.mrf.mxu0
        %v883 = vadd.f32 %v794, %v882
        %884 = vmatmul.bf16.gmra.mxu0 %v511
        %v885 = vpop.f32.mrf.mxu0
        %v886 = vadd.f32 %v797, %v885
        %v887 = vpop.f32.mrf.mxu0
        %v888 = vadd.f32 %v799, %v887
        %889 = vmatmul.bf16.gmra.mxu0 %v514
        %v890 = vpop.f32.mrf.mxu0
        %v891 = vadd.f32 %v802, %v890
        %v892 = vpop.f32.mrf.mxu0
        %v893 = vadd.f32 %v804, %v892
        %894 = vmatmul.bf16.gmra.mxu0 %v517
        %v895 = vpop.f32.mrf.mxu0
        %v896 = vadd.f32 %v807, %v895
        %v897 = vpop.f32.mrf.mxu0
        %v898 = vadd.f32 %v809, %v897
        %899 = vmatmul.bf16.gmra.mxu0 %v520
        %v900 = vpop.f32.mrf.mxu0
        %v901 = vadd.f32 %v812, %v900
        %v902 = vpop.f32.mrf.mxu0
        %v903 = vadd.f32 %v814, %v902
        %904 = vmatmul.bf16.gmra.mxu0 %v523
        %v905 = vpop.f32.mrf.mxu0
        %v906 = vadd.f32 %v817, %v905
        %v907 = vpop.f32.mrf.mxu0
        %v908 = vadd.f32 %v819, %v907
        %909 = vmatmul.bf16.gmra.mxu0 %v526
        %v910 = vpop.f32.mrf.mxu0
        %v911 = vadd.f32 %v822, %v910
        %v912 = vpop.f32.mrf.mxu0
        %v913 = vadd.f32 %v824, %v912
        %914 = vmatmul.bf16.gmra.mxu0 %v529
        %v915 = vpop.f32.mrf.mxu0
        %v916 = vadd.f32 %v827, %v915
        %v917 = vpop.f32.mrf.mxu0
        %v918 = vadd.f32 %v829, %v917
        %919 = vmatmul.bf16.gmra.mxu0 %v532
        %v920 = vpop.f32.mrf.mxu0
        %v921 = vadd.f32 %v832, %v920
        %v922 = vpop.f32.mrf.mxu0
        %v923 = vadd.f32 %v834, %v922
        %924 = vmatmul.bf16.gmra.mxu0 %v535
        %v925 = vpop.f32.mrf.mxu0
        %v926 = vadd.f32 %v837, %v925
        %v927 = vpop.f32.mrf.mxu0
        %v928 = vadd.f32 %v839, %v927
        %929 = vmatmul.bf16.gmra.mxu0 %v538
        %v930 = vpop.f32.mrf.mxu0
        %v931 = vadd.f32 %v842, %v930
        %v932 = vpop.f32.mrf.mxu0
        %v933 = vadd.f32 %v844, %v932
        %934 = vdwg.mxu0
        %935 = vmatpush.bf16.msra.mxu0 0
        %936 = vmatpush.bf16.msra.mxu0 0
        %937 = vmatpush.bf16.msra.mxu0 %v755
        %938 = vmatpush.bf16.msra.mxu0 %v678
        %939 = vmatpush.bf16.msra.mxu0 %v677
        %940 = vmatpush.bf16.msra.mxu0 %v676
        %941 = vmatpush.bf16.msra.mxu0 %v675
        %942 = vmatpush.bf16.msra.mxu0 %v674
        %943 = vmatmul.bf16.gmra.mxu0 %v703
        %v944 = vpop.f32.mrf.mxu0
        %v945 = vadd.f32 %v856, %v944
        %v946 = vpop.f32.mrf.mxu0
        %v947 = vadd.f32 %v858, %v946
        %948 = vmatmul.bf16.gmra.mxu0 %v706
        %v949 = vpop.f32.mrf.mxu0
        %v950 = vadd.f32 %v861, %v949
        %v951 = vpop.f32.mrf.mxu0
        %v952 = vadd.f32 %v863, %v951
        %953 = vmatmul.bf16.gmra.mxu0 %v709
        %v954 = vpop.f32.mrf.mxu0
        %v955 = vadd.f32 %v866, %v954
        %v956 = vpop.f32.mrf.mxu0
        %v957 = vadd.f32 %v868, %v956
        %958 = vmatmul.bf16.gmra.mxu0 %v712
        %v959 = vpop.f32.mrf.mxu0
        %v960 = vadd.f32 %v871, %v959
        %v961 = vpop.f32.mrf.mxu0
        %v962 = vadd.f32 %v873, %v961
        %963 = vmatmul.bf16.gmra.mxu0 %v715
        %v964 = vpop.f32.mrf.mxu0
        %v965 = vadd.f32 %v876, %v964
        %v966 = vpop.f32.mrf.mxu0
        %v967 = vadd.f32 %v878, %v966
        %968 = vmatmul.bf16.gmra.mxu0 %v718
        %v969 = vpop.f32.mrf.mxu0
        %v970 = vadd.f32 %v881, %v969
        %v971 = vpop.f32.mrf.mxu0
        %v972 = vadd.f32 %v883, %v971
        %973 = vmatmul.bf16.gmra.mxu0 %v721
        %v974 = vpop.f32.mrf.mxu0
        %v975 = vadd.f32 %v886, %v974
        %v976 = vpop.f32.mrf.mxu0
        %v977 = vadd.f32 %v888, %v976
        %978 = vmatmul.bf16.gmra.mxu0 %v724
        %v979 = vpop.f32.mrf.mxu0
        %v980 = vadd.f32 %v891, %v979
        %v981 = vpop.f32.mrf.mxu0
        %v982 = vadd.f32 %v893, %v981
        %983 = vmatmul.bf16.gmra.mxu0 %v727
        %v984 = vpop.f32.mrf.mxu0
        %v985 = vadd.f32 %v896, %v984
        %v986 = vpop.f32.mrf.mxu0
        %v987 = vadd.f32 %v898, %v986
        %988 = vmatmul.bf16.gmra.mxu0 %v730
        %v989 = vpop.f32.mrf.mxu0
        %v990 = vadd.f32 %v901, %v989
        %v991 = vpop.f32.mrf.mxu0
        %v992 = vadd.f32 %v903, %v991
        %993 = vmatmul.bf16.gmra.mxu0 %v733
        %v994 = vpop.f32.mrf.mxu0
        %v995 = vadd.f32 %v906, %v994
        %v996 = vpop.f32.mrf.mxu0
        %v997 = vadd.f32 %v908, %v996
        %998 = vmatmul.bf16.gmra.mxu0 %v736
        %v999 = vpop.f32.mrf.mxu0
        %v1000 = vadd.f32 %v911, %v999
        %v1001 = vpop.f32.mrf.mxu0
        %v1002 = vadd.f32 %v913, %v1001
        %1003 = vmatmul.bf16.gmra.mxu0 %v739
        %v1004 = vpop.f32.mrf.mxu0
        %v1005 = vadd.f32 %v916, %v1004
        %v1006 = vpop.f32.mrf.mxu0
        %v1007 = vadd.f32 %v918, %v1006
        %1008 = vmatmul.bf16.gmra.mxu0 %v742
        %v1009 = vpop.f32.mrf.mxu0
        %v1010 = vadd.f32 %v921, %v1009
        %v1011 = vpop.f32.mrf.mxu0
        %v1012 = vadd.f32 %v923, %v1011
        %1013 = vmatmul.bf16.gmra.mxu0 %v745
        %v1014 = vpop.f32.mrf.mxu0
        %v1015 = vadd.f32 %v926, %v1014
        %v1016 = vpop.f32.mrf.mxu0
        %v1017 = vadd.f32 %v928, %v1016
        %1018 = vmatmul.bf16.gmra.mxu0 %v748
        %v1019 = vpop.f32.mrf.mxu0
        %v1020 = vadd.f32 %v931, %v1019
        %v1021 = vpop.f32.mrf.mxu0
        %v1022 = vadd.f32 %v933, %v1021
        %1023 = vdwg.mxu0
        %vm1024 = vcmp.ge.f32.partialorder %v945, 0.0
        %vm1025 = vcmp.ge.f32.partialorder %v947, 0.0
        %vm1026 = vcmp.ge.f32.partialorder %v950, 0.0
        %vm1027 = vcmp.ge.f32.partialorder %v952, 0.0
        %vm1028 = vcmp.ge.f32.partialorder %v955, 0.0
        %vm1029 = vcmp.ge.f32.partialorder %v957, 0.0
        %vm1030 = vcmp.ge.f32.partialorder %v960, 0.0
        %vm1031 = vcmp.ge.f32.partialorder %v962, 0.0
        %vm1032 = vcmp.ge.f32.partialorder %v965, 0.0
        %vm1033 = vcmp.ge.f32.partialorder %v967, 0.0
        %vm1034 = vcmp.ge.f32.partialorder %v970, 0.0
        %vm1035 = vcmp.ge.f32.partialorder %v972, 0.0
        %vm1036 = vcmp.ge.f32.partialorder %v975, 0.0
        %vm1037 = vcmp.ge.f32.partialorder %v977, 0.0
        %vm1038 = vcmp.ge.f32.partialorder %v980, 0.0
        %vm1039 = vcmp.ge.f32.partialorder %v982, 0.0
        %vm1040 = vcmp.ge.f32.partialorder %v985, 0.0
        %vm1041 = vcmp.ge.f32.partialorder %v987, 0.0
        %vm1042 = vcmp.ge.f32.partialorder %v990, 0.0
        %vm1043 = vcmp.ge.f32.partialorder %v992, 0.0
        %vm1044 = vcmp.ge.f32.partialorder %v995, 0.0
        %vm1045 = vcmp.ge.f32.partialorder %v997, 0.0
        %vm1046 = vcmp.ge.f32.partialorder %v1000, 0.0
        %vm1047 = vcmp.ge.f32.partialorder %v1002, 0.0
        %vm1048 = vcmp.ge.f32.partialorder %v1005, 0.0
        %vm1049 = vcmp.ge.f32.partialorder %v1007, 0.0
        %vm1050 = vcmp.ge.f32.partialorder %v1010, 0.0
        %vm1051 = vcmp.ge.f32.partialorder %v1012, 0.0
        %vm1052 = vcmp.ge.f32.partialorder %v1015, 0.0
        %vm1053 = vcmp.ge.f32.partialorder %v1017, 0.0
        %vm1054 = vcmp.ge.f32.partialorder %v1020, 0.0
        %vm1055 = vcmp.ge.f32.partialorder %v1022, 0.0
        %v1056 = vmul.f32 %v945, 0.01
        %v1057 = vmul.f32 %v947, 0.01
        %v1058 = vmul.f32 %v950, 0.01
        %v1059 = vmul.f32 %v952, 0.01
        %v1060 = vmul.f32 %v955, 0.01
        %v1061 = vmul.f32 %v957, 0.01
        %v1062 = vmul.f32 %v960, 0.01
        %v1063 = vmul.f32 %v962, 0.01
        %v1064 = vmul.f32 %v965, 0.01
        %v1065 = vmul.f32 %v967, 0.01
        %v1066 = vmul.f32 %v970, 0.01
        %v1067 = vmul.f32 %v972, 0.01
        %v1068 = vmul.f32 %v975, 0.01
        %v1069 = vmul.f32 %v977, 0.01
        %v1070 = vmul.f32 %v980, 0.01
        %v1071 = vmul.f32 %v982, 0.01
        %v1072 = vmul.f32 %v985, 0.01
        %v1073 = vmul.f32 %v987, 0.01
        %v1074 = vmul.f32 %v990, 0.01
        %v1075 = vmul.f32 %v992, 0.01
        %v1076 = vmul.f32 %v995, 0.01
        %v1077 = vmul.f32 %v997, 0.01
        %v1078 = vmul.f32 %v1000, 0.01
        %v1079 = vmul.f32 %v1002, 0.01
        %v1080 = vmul.f32 %v1005, 0.01
        %v1081 = vmul.f32 %v1007, 0.01
        %v1082 = vmul.f32 %v1010, 0.01
        %v1083 = vmul.f32 %v1012, 0.01
        %v1084 = vmul.f32 %v1015, 0.01
        %v1085 = vmul.f32 %v1017, 0.01
        %v1086 = vmul.f32 %v1020, 0.01
        %v1087 = vmul.f32 %v1022, 0.01
        %v1088 = vsel %vm1024, %v945, %v1056
        %v1089 = vsel %vm1025, %v947, %v1057
        %v1090 = vsel %vm1026, %v950, %v1058
        %v1091 = vsel %vm1027, %v952, %v1059
        %v1092 = vsel %vm1028, %v955, %v1060
        %v1093 = vsel %vm1029, %v957, %v1061
        %v1094 = vsel %vm1030, %v960, %v1062
        %v1095 = vsel %vm1031, %v962, %v1063
        %v1096 = vsel %vm1032, %v965, %v1064
        %v1097 = vsel %vm1033, %v967, %v1065
        %v1098 = vsel %vm1034, %v970, %v1066
        %v1099 = vsel %vm1035, %v972, %v1067
        %v1100 = vsel %vm1036, %v975, %v1068
        %v1101 = vsel %vm1037, %v977, %v1069
        %v1102 = vsel %vm1038, %v980, %v1070
        %v1103 = vsel %vm1039, %v982, %v1071
        %v1104 = vsel %vm1040, %v985, %v1072
        %v1105 = vsel %vm1041, %v987, %v1073
        %v1106 = vsel %vm1042, %v990, %v1074
        %v1107 = vsel %vm1043, %v992, %v1075
        %v1108 = vsel %vm1044, %v995, %v1076
        %v1109 = vsel %vm1045, %v997, %v1077
        %v1110 = vsel %vm1046, %v1000, %v1078
        %v1111 = vsel %vm1047, %v1002, %v1079
        %v1112 = vsel %vm1048, %v1005, %v1080
        %v1113 = vsel %vm1049, %v1007, %v1081
        %v1114 = vsel %vm1050, %v1010, %v1082
        %v1115 = vsel %vm1051, %v1012, %v1083
        %v1116 = vsel %vm1052, %v1015, %v1084
        %v1117 = vsel %vm1053, %v1017, %v1085
        %v1118 = vsel %vm1054, %v1020, %v1086
        %v1119 = vsel %vm1055, %v1022, %v1087
        %v1120 = vpack.c.bf16 %v1088, %v1088
        %v1121 = vpack.c.bf16 %v1089, %v1089
        %v1122 = vpack.c.bf16 %v1090, %v1090
        %v1123 = vpack.c.bf16 %v1091, %v1091
        %v1124 = vpack.c.bf16 %v1092, %v1092
        %v1125 = vpack.c.bf16 %v1093, %v1093
        %v1126 = vpack.c.bf16 %v1094, %v1094
        %v1127 = vpack.c.bf16 %v1095, %v1095
        %v1128 = vpack.c.bf16 %v1096, %v1096
        %v1129 = vpack.c.bf16 %v1097, %v1097
        %v1130 = vpack.c.bf16 %v1098, %v1098
        %v1131 = vpack.c.bf16 %v1099, %v1099
        %v1132 = vpack.c.bf16 %v1100, %v1100
        %v1133 = vpack.c.bf16 %v1101, %v1101
        %v1134 = vpack.c.bf16 %v1102, %v1102
        %v1135 = vpack.c.bf16 %v1103, %v1103
        %v1136 = vpack.c.bf16 %v1104, %v1104
        %v1137 = vpack.c.bf16 %v1105, %v1105
        %v1138 = vpack.c.bf16 %v1106, %v1106
        %v1139 = vpack.c.bf16 %v1107, %v1107
        %v1140 = vpack.c.bf16 %v1108, %v1108
        %v1141 = vpack.c.bf16 %v1109, %v1109
        %v1142 = vpack.c.bf16 %v1110, %v1110
        %v1143 = vpack.c.bf16 %v1111, %v1111
        %v1144 = vpack.c.bf16 %v1112, %v1112
        %v1145 = vpack.c.bf16 %v1113, %v1113
        %v1146 = vpack.c.bf16 %v1114, %v1114
        %v1147 = vpack.c.bf16 %v1115, %v1115
        %v1148 = vpack.c.bf16 %v1116, %v1116
        %v1149 = vpack.c.bf16 %v1117, %v1117
        %v1150 = vpack.c.bf16 %v1118, %v1118
        %v1151 = vpack.c.bf16 %v1119, %v1119
        %1152 = vst [vmem:[%s204] sm:$0xf] %v1120
        %1153 = vst [vmem:[%s204 + $0x4] sm:$0xf] %v1121
        %1154 = vst [vmem:[%s204 + $0x8] sm:$0xf] %v1122
        %1155 = vst [vmem:[%s204 + $0xc] sm:$0xf] %v1123
        %1156 = vst [vmem:[%s204 + $0x10] sm:$0xf] %v1124
        %1157 = vst [vmem:[%s204 + $0x14] sm:$0xf] %v1125
        %1158 = vst [vmem:[%s204 + $0x18] sm:$0xf] %v1126
        %1159 = vst [vmem:[%s204 + $0x1c] sm:$0xf] %v1127
        %1160 = vst [vmem:[%s204 + $0x20] sm:$0xf] %v1128
        %1161 = vst [vmem:[%s204 + $0x24] sm:$0xf] %v1129
        %1162 = vst [vmem:[%s204 + $0x28] sm:$0xf] %v1130
        %1163 = vst [vmem:[%s204 + $0x2c] sm:$0xf] %v1131
        %1164 = vst [vmem:[%s204 + $0x30] sm:$0xf] %v1132
        %1165 = vst [vmem:[%s204 + $0x34] sm:$0xf] %v1133
        %1166 = vst [vmem:[%s204 + $0x38] sm:$0xf] %v1134
        %1167 = vst [vmem:[%s204 + $0x3c] sm:$0xf] %v1135
        %1168 = vst [vmem:[%s204 + $0x40] sm:$0xf] %v1136
        %1169 = vst [vmem:[%s204 + $0x44] sm:$0xf] %v1137
        %1170 = vst [vmem:[%s204 + $0x48] sm:$0xf] %v1138
        %1171 = vst [vmem:[%s204 + $0x4c] sm:$0xf] %v1139
        %1172 = vst [vmem:[%s204 + $0x50] sm:$0xf] %v1140
        %1173 = vst [vmem:[%s204 + $0x54] sm:$0xf] %v1141
        %1174 = vst [vmem:[%s204 + $0x58] sm:$0xf] %v1142
        %1175 = vst [vmem:[%s204 + $0x5c] sm:$0xf] %v1143
        %1176 = vst [vmem:[%s204 + $0x60] sm:$0xf] %v1144
        %1177 = vst [vmem:[%s204 + $0x64] sm:$0xf] %v1145
        %1178 = vst [vmem:[%s204 + $0x68] sm:$0xf] %v1146
        %1179 = vst [vmem:[%s204 + $0x6c] sm:$0xf] %v1147
        %1180 = vst [vmem:[%s204 + $0x70] sm:$0xf] %v1148
        %1181 = vst [vmem:[%s204 + $0x74] sm:$0xf] %v1149
        %1182 = vst [vmem:[%s204 + $0x78] sm:$0xf] %v1150
        %1183 = vst [vmem:[%s204 + $0x7c] sm:$0xf] %v1151
        %s1184 = sand.u32 %s117, 1
        %s1185 = scalar_lea.sflag [#allocation3], %s1184
        %s1186 = sand.u32 %s117, 1
        %s1187 = smul.addr %s1186, 128
        %s1188 = scalar_lea.vmem [#allocation2], %s1187
        // Predicated region
        $region33: #{tpu_custom_call.1} parent=31 // pred_check
          %p1189 = pneg %p127
        $region34: #{tpu_custom_call.1} parent=31 // pred_check_branch
          %1191 = sbr.rel (%p1189) target = $region36
        $region35: #{tpu_custom_call.1} parent=31 // pred_region
          %s1192 = smul.u32 32, %s21
          %1194 = vsyncadd %s1185, 0
          %s1195 = sadd.s32 %s22, %s1192
          %s1196 = smul.addr %s1195, 4
          %s1197 = scalar_lea.hbm %s3, %s1196
          %s1198 = sshll.u32 %s1188, 4
          %s1199 = int_to_ptr.vmem [resolvable:$true] %s1198
          %s1200 = sshll.u32 %s1197, 4
          %s1201 = int_to_ptr.hbm [resolvable:$true] %s1200
          %1206 = dma.vmem_to_hbm [thread:$0]  %s1199, 2048, %s1201, %s1185, 64, 64, 4
        $region36: #{tpu_custom_call.1} parent=31 // pred_fallthru
          _
      $region32: #{tpu_custom_call.1} parent=5 // pred_fallthru
        _
      %p1207 = scmp.le.s32.totalorder 2, %s12
      // Predicated region
      $region37: #{tpu_custom_call.1} parent=5 // pred_check
        %p1208 = pneg %p1207
      $region38: #{tpu_custom_call.1} parent=5 // pred_check_branch
        %1210 = sbr.rel (%p1208) target = $region40
      $region39: #{tpu_custom_call.1} parent=5 // pred_region
        %s1211 = ssub.s32 %s12, 2
        // Predicated region
        $region41: #{tpu_custom_call.1} parent=39 // pred_check
          %p1212 = pneg %p133
        $region42: #{tpu_custom_call.1} parent=39 // pred_check_branch
          %1214 = sbr.rel (%p1212) target = $region44
        $region43: #{tpu_custom_call.1} parent=39 // pred_region
          %s1215 = sand.u32 %s118, 1
          %s1216 = scalar_lea.sflag [#allocation3], %s1215
          %s1217 = sand.u32 %s118, 1
          %s1218 = smul.addr %s1217, 128
          %s1219 = scalar_lea.vmem [#allocation2], %s1218
          %1221 = dma.done %s1216, 2048
        $region44: #{tpu_custom_call.1} parent=39 // pred_fallthru
          _
      $region40: #{tpu_custom_call.1} parent=5 // pred_fallthru
        _
    $region6: #{tpu_custom_call.1} parent=1 // loop_footer
      %s16 = sadd.s32 1, %s12
    $region7: #{tpu_custom_call.1} parent=1 // loop_footer_branch
      %11 = sbr.rel target = $region3
    $region8: #{tpu_custom_call.1} parent=1 // loop_exit
      _
    %1222 = vsyncpa [#allocation3], 1
    %s1223 = scalar_lea.sflag [#allocation3], 1
    %1224 = vsyncpa %s1223, 1

</llo_original>
